<compile_context>
chip_gen: v5e
topology: v5e:2x2
jax: 0.10.0
libtpu: 0.0.40
codegen_flags: <defaults>
</compile_context>

<pallas_src>
import math

import jax
import jax.numpy as jnp
from jax.experimental import pallas as pl
from jax.experimental.pallas import tpu as pltpu


# ---------------------------------------------------------------------------
# Kernel
# ---------------------------------------------------------------------------
def _conv1x1_bn_relu_dup_kernel(x_ref, w_ref, shift_ref, o_ref):
    # x_ref:     (cin, TL)      input tile, spatial on the lane axis
    # w_ref:     (out_ch, cin)  conv weight with BN scale + channel dup folded in
    # shift_ref: (out_ch, 1)    f32 per-channel shift (beta - mean*scale), duplicated
    # o_ref:     (out_ch, TL)   output tile (f32 or bf16)
    y = jnp.dot(w_ref[...], x_ref[...], preferred_element_type=jnp.float32)
    y = y + shift_ref[...]                                  # f32 epilogue
    o_ref[...] = jnp.maximum(y, 0.0).astype(o_ref.dtype)
    # TODO(synk): if the Mosaic dump shows a relayout feeding the MXU for this tiny
    # contraction (cin<=8), switch to an unrolled VPU broadcast-FMA over cin.


# ---------------------------------------------------------------------------
# Tiling / VMEM sizing
# ---------------------------------------------------------------------------
def _sublane_multiple(nbytes):
    # Physical sublane tiling: (8,128) f32, (16,128) bf16, (32,128) int8.
    return max(8, 32 // max(1, nbytes))


def _vmem_budget_and_limit():
    """Generation-gated VMEM sizing (v5e/v6e: 128 MiB physical; v7x: 64 MiB/TC)."""
    cap = 64 * 1024 * 1024  # conservative (v7x-safe) fallback
    try:
        info = pltpu.get_tpu_info()
        cap = int(getattr(info, "vmem_capacity_bytes", cap) or cap)
    except Exception:
        pass
    if cap >= 96 * 1024 * 1024:                     # v5e / v6e (128 MiB)
        return 48 * 1024 * 1024, 96 * 1024 * 1024
    return 24 * 1024 * 1024, 48 * 1024 * 1024       # v7x (64 MiB per TC)


def _pick_lane_tile(L, n_batch, cin, out_ch, in_bytes, out_bytes, budget_bytes,
                    max_lanes=8192, min_grid_steps=4):
    """Pick the spatial (lane) tile.

    Memory-bound kernel: tiles big enough for efficient DMA (pipelining plateaus
    well before 8-16K lanes), small enough to (a) fit the scoped-VMEM budget with
    double buffering and sublane padding accounted for, and (b) leave multiple
    parallel grid steps for megacore sharding on v7x.
    """
    sl_in = _sublane_multiple(in_bytes)
    sl_out = _sublane_multiple(out_bytes)
    cin_p = -(-cin // sl_in) * sl_in
    oc_p = -(-out_ch // sl_out) * sl_out
    per_lane = 2 * (cin_p * in_bytes + oc_p * out_bytes)    # 2x: double-buffered blocks
    tl = min(max_lanes, max(128, budget_bytes // per_lane))
    tl = (tl // 128) * 128
    l128 = -(-L // 128) * 128
    tl = min(tl, l128)
    # Ensure enough parallel grid steps (v7x has 2 TensorCores with independent DMA).
    while n_batch * (-(-L // tl)) < min_grid_steps and tl > 128:
        tl = max(128, ((tl // 2) // 128) * 128)
    return tl


# ---------------------------------------------------------------------------
# pallas_call wrapper
# ---------------------------------------------------------------------------
def conv1x1_bn_relu_dup_pallas(x3d, w_full, shift_full, *, out_dtype, tl, vmem_limit):
    """x3d: [N, C_in, L]; w_full: [out_ch, C_in]; shift_full: [out_ch, 1] f32."""
    n, cin, L = x3d.shape
    out_ch = w_full.shape[0]
    assert tl % 128 == 0, tl

    grid = (n, pl.cdiv(L, tl))   # partial last spatial block is masked by Pallas
    return pl.pallas_call(
        _conv1x1_bn_relu_dup_kernel,
        out_shape=jax.ShapeDtypeStruct((n, out_ch, L), out_dtype),
        grid_spec=pltpu.PrefetchScalarGridSpec(
            num_scalar_prefetch=0,
            grid=grid,
            in_specs=[
                pl.BlockSpec((pl.Squeezed(), cin, tl), lambda b, l: (b, 0, l)),
                pl.BlockSpec((out_ch, cin), lambda b, l: (0, 0)),
                pl.BlockSpec((out_ch, 1), lambda b, l: (0, 0)),
            ],
            out_specs=pl.BlockSpec((pl.Squeezed(), out_ch, tl), lambda b, l: (b, 0, l)),
        ),
        compiler_params=pltpu.CompilerParams(
            dimension_semantics=("parallel", "parallel"),
            vmem_limit_bytes=vmem_limit,
        ),
    )(x3d, w_full, shift_full)


# ---------------------------------------------------------------------------
# Module parameters + forward
# ---------------------------------------------------------------------------
class ConvOurCParams:
    """Deterministic parameter container mirroring Conv_our_c.__init__ shapes."""

    def __init__(self, key, in_ch, out_ch, stride=1, eps=1e-5):
        self.in_ch = in_ch
        self.out_ch = out_ch
        self.stride = stride
        self.med_ch = math.ceil(out_ch / 2)
        k_w, k_g, k_b, k_m, k_v = jax.random.split(key, 5)
        # nn.Conv2d(in_ch, med_ch, 1, stride, bias=False): weight (med_ch, in_ch, 1, 1)
        bound = 1.0 / math.sqrt(in_ch)
        self.conv_w = jax.random.uniform(
            k_w, (self.med_ch, in_ch, 1, 1), jnp.float32, -bound, bound
        )
        # BatchNorm2d(med_ch) eval-mode params with deterministic "running" stats.
        self.bn_gamma = 1.0 + 0.1 * jax.random.normal(k_g, (self.med_ch,), jnp.float32)
        self.bn_beta = 0.1 * jax.random.normal(k_b, (self.med_ch,), jnp.float32)
        self.bn_mean = 0.1 * jax.random.normal(k_m, (self.med_ch,), jnp.float32)
        self.bn_var = jnp.abs(
            1.0 + 0.1 * jax.random.normal(k_v, (self.med_ch,), jnp.float32)
        )
        self.eps = eps


def conv_our_c_forward(params: ConvOurCParams, x_nchw, *, out_dtype=None):
    """x_nchw: [N, C_in, H, W] -> [N, out_ch, H_out, W_out].

    Kernel reads x in its incoming dtype (no standalone cast pass); output dtype
    defaults to x's dtype, override with out_dtype (e.g. jnp.bfloat16 to halve
    HBM writeback on this write-dominated op).
    """
    n, cin, h, w = x_nchw.shape
    assert cin == params.in_ch
    s = params.stride
    if s == 1:
        xs = x_nchw
    else:
        # TODO(synk): fold the stride-s spatial subsample into the kernel
        # (Element-indexed row block + strided lane read) to avoid this extra
        # HBM pass over x for stride > 1.
        xs = x_nchw[:, :, ::s, ::s]
    ho, wo = xs.shape[2], xs.shape[3]
    L = ho * wo

    med, out_ch = params.med_ch, params.out_ch
    dup = out_ch - med  # channels duplicated by cat([y, y])[:, :out_ch]

    # Fold BN eval-mode scale into the conv weight; fold channel duplication into
    # duplicated weight/shift rows so the kernel writes the final out_ch directly.
    w_med = params.conv_w.reshape(med, cin)                         # (med, cin)
    scale = params.bn_gamma / jnp.sqrt(params.bn_var + params.eps)  # (med,)
    shift = params.bn_beta - params.bn_mean * scale                 # (med,)
    w_scaled = w_med * scale[:, None]
    w_full = jnp.concatenate([w_scaled, w_scaled[:dup]], axis=0)    # (out_ch, cin)
    shift_full = jnp.concatenate([shift, shift[:dup]], axis=0).reshape(out_ch, 1)
    shift_full = shift_full.astype(jnp.float32)

    compute_dtype = x_nchw.dtype            # no wrapper cast of x (extra HBM pass)
    if out_dtype is None:
        out_dtype = compute_dtype
    w_full = w_full.astype(compute_dtype)   # tiny array; negligible

    x3d = xs.reshape(n, cin, L)             # NCHW -> [N, C, H*W]: metadata-only

    budget, vmem_limit = _vmem_budget_and_limit()
    in_b = jnp.dtype(compute_dtype).itemsize
    out_b = jnp.dtype(out_dtype).itemsize
    tl = _pick_lane_tile(L, n, cin, out_ch, in_b, out_b, budget)

    y = conv1x1_bn_relu_dup_pallas(
        x3d, w_full, shift_full, out_dtype=out_dtype, tl=tl, vmem_limit=vmem_limit
    )                                        # (N, out_ch, L), no pad / slice passes
    return y.reshape(n, out_ch, ho, wo)


def conv_our_c_reference(params: ConvOurCParams, x_nchw):
    """Pure-JAX reference (no Pallas) for correctness checking."""
    s = params.stride
    xs = x_nchw[:, :, ::s, ::s]
    y = jnp.einsum(
        "nchw,oc->nohw", xs, params.conv_w.reshape(params.med_ch, params.in_ch)
    )
    scale = params.bn_gamma / jnp.sqrt(params.bn_var + params.eps)
    shift = params.bn_beta - params.bn_mean * scale
    y = y * scale[None, :, None, None] + shift[None, :, None, None]
    y = jnp.maximum(y, 0.0)
    return jnp.concatenate([y, y], axis=1)[:, : params.out_ch]


if __name__ == "__main__":
    key = jax.random.PRNGKey(0)
    k_param, k_x, k_param2, k_x2 = jax.random.split(key, 4)

    # Case 1: baseline small shape, f32 in -> f32 out (tight tolerance).
    in_ch, out_ch = 4, 8
    params = ConvOurCParams(k_param, in_ch, out_ch, stride=1)
    x = jax.random.normal(k_x, (2, in_ch, 16, 16), jnp.float32)  # NCHW
    ref = conv_our_c_reference(params, x)

    out = jax.block_until_ready(conv_our_c_forward(params, x))
    assert out.shape == (2, out_ch, 16, 16), out.shape
    assert out.dtype == jnp.float32
    assert jnp.allclose(out, ref, atol=1e-5, rtol=1e-5), "f32 mismatch vs reference"

    # bf16-output fast path (halves HBM writeback; f32 accumulate + epilogue).
    out_b16 = jax.block_until_ready(
        conv_our_c_forward(params, x, out_dtype=jnp.bfloat16)
    )
    assert out_b16.dtype == jnp.bfloat16
    assert jnp.allclose(out_b16.astype(jnp.float32), ref, atol=5e-2, rtol=5e-2), \
        "bf16-out mismatch vs reference"

    # "x already arrives in bf16 upstream" path: kernel reads bf16 directly.
    out_xb16 = jax.block_until_ready(conv_our_c_forward(params, x.astype(jnp.bfloat16)))
    assert out_xb16.dtype == jnp.bfloat16
    assert jnp.allclose(out_xb16.astype(jnp.float32), ref, atol=5e-2, rtol=5e-2), \
        "bf16-in mismatch vs reference"

    # Case 2: odd out_ch, stride=2, spatial 9x9=81 (not a multiple of 128) —
    # exercises the partial-last-block masking and asymmetric channel duplication.
    params2 = ConvOurCParams(k_param2, 4, 7, stride=2)
    x2 = jax.random.normal(k_x2, (2, 4, 18, 18), jnp.float32)
    out2 = jax.block_until_ready(conv_our_c_forward(params2, x2))
    ref2 = conv_our_c_reference(params2, x2)
    assert out2.shape == (2, 7, 9, 9), out2.shape
    assert jnp.allclose(out2, ref2, atol=1e-5, rtol=1e-5), "case2 mismatch vs reference"

    print("KERNEL_OK")
</pallas_src>

<mosaic_0001>
module attributes {stable_mosaic.version = 11 : i64} {
  func.func @_conv1x1_bn_relu_dup_kernel(%arg0: i32, %arg1: i32, %arg2: memref<1x4x128xf32, #tpu.memory_space<vmem>>, %arg3: memref<8x4xf32, #tpu.memory_space<vmem>>, %arg4: memref<8x1xf32, #tpu.memory_space<vmem>>, %arg5: memref<1x8x128xf32, #tpu.memory_space<vmem>>) attributes {dimension_semantics = [#tpu.dimension_semantics<parallel>, #tpu.dimension_semantics<parallel>], iteration_bounds = array<i64: 2, 2>, scalar_prefetch = 0 : i64, scratch_operands = 0 : i64, tpu.core_type = #tpu.core_type<tc>, window_params = [{transform_indices = @transform_0, window_bounds = array<i64: 1, 4, 128>}, {pipeline_mode = #tpu.pipeline_mode<synchronous>, transform_indices = @transform_1, window_bounds = array<i64: 8, 4>}, {pipeline_mode = #tpu.pipeline_mode<synchronous>, transform_indices = @transform_2, window_bounds = array<i64: 8, 1>}, {transform_indices = @transform_3, window_bounds = array<i64: 1, 8, 128>}]} {
    %c0 = arith.constant 0 : index
    %c0_0 = arith.constant 0 : index
    %0 = vector.load %arg3[%c0, %c0_0] : memref<8x4xf32, #tpu.memory_space<vmem>>, vector<8x4xf32>
    %c0_1 = arith.constant 0 : index
    %c0_2 = arith.constant 0 : index
    %c0_3 = arith.constant 0 : index
    %1 = vector.load %arg2[%c0_1, %c0_2, %c0_3] : memref<1x4x128xf32, #tpu.memory_space<vmem>>, vector<1x4x128xf32>
    %2 = vector.shape_cast %1 : vector<1x4x128xf32> to vector<4x128xf32>
    %cst = arith.constant dense<0.000000e+00> : vector<8x128xf32>
    %3 = tpu.matmul %0, %2, %cst {dimension_numbers = #tpu.dot_dimension_numbers<[1], [0], [0], [1], [0, 0, 1, 1], [], []>} : vector<8x4xf32>, vector<4x128xf32>, vector<8x128xf32> -> vector<8x128xf32>
    %c0_4 = arith.constant 0 : index
    %c0_5 = arith.constant 0 : index
    %4 = vector.load %arg4[%c0_4, %c0_5] : memref<8x1xf32, #tpu.memory_space<vmem>>, vector<8x1xf32>
    %5 = vector.broadcast %4 : vector<8x1xf32> to vector<8x128xf32>
    %6 = arith.addf %3, %5 : vector<8x128xf32>
    %cst_6 = arith.constant 0.000000e+00 : f32
    %7 = vector.broadcast %cst_6 : f32 to vector<8x128xf32>
    %8 = arith.maximumf %6, %7 : vector<8x128xf32>
    %c0_7 = arith.constant 0 : index
    %c0_8 = arith.constant 0 : index
    %c0_9 = arith.constant 0 : index
    %9 = vector.load %arg5[%c0_7, %c0_8, %c0_9] : memref<1x8x128xf32, #tpu.memory_space<vmem>>, vector<1x8x128xf32>
    %10 = vector.shape_cast %9 : vector<1x8x128xf32> to vector<8x128xf32>
    %11 = vector.shape_cast %8 : vector<8x128xf32> to vector<1x8x128xf32>
    tpu.vector_store %arg5[%c0_7, %c0_8, %c0_9], %11 {strides = array<i32>} : memref<1x8x128xf32, #tpu.memory_space<vmem>>, vector<1x8x128xf32>,
    return
  }
  func.func @transform_0(%arg0: i32, %arg1: i32) -> (i32, i32, i32) {
    %c0_i32 = arith.constant 0 : i32
    %c0_i32_0 = arith.constant 0 : i32
    return %arg0, %c0_i32, %arg1 : i32, i32, i32
  }
  func.func @transform_1(%arg0: i32, %arg1: i32) -> (i32, i32) {
    %c0_i32 = arith.constant 0 : i32
    %c0_i32_0 = arith.constant 0 : i32
    %c0_i32_1 = arith.constant 0 : i32
    return %c0_i32, %c0_i32_0 : i32, i32
  }
  func.func @transform_2(%arg0: i32, %arg1: i32) -> (i32, i32) {
    %c0_i32 = arith.constant 0 : i32
    %c0_i32_0 = arith.constant 0 : i32
    %c0_i32_1 = arith.constant 0 : i32
    return %c0_i32, %c0_i32_0 : i32, i32
  }
  func.func @transform_3(%arg0: i32, %arg1: i32) -> (i32, i32, i32) {
    %c0_i32 = arith.constant 0 : i32
    %c0_i32_0 = arith.constant 0 : i32
    return %arg0, %c0_i32, %arg1 : i32, i32, i32
  }
}

</mosaic_0001>

<llo_original>
// kernel: tpu_custom_call.1
$region0: #{tpu_custom_call.1}
  #allocation0 [shape = 'u32[]', space=smem, size = 0x4, offset = 0x4, fixed_abs, tag = 'smem constant byte address 0x4 - core index']
  #allocation1 [shape = 'u32[72,128]{1,0:T(1,128)}', space=vmem, size = 0x9000, scoped, tag = 'internal scratch']
  %s0 = inlined_call_operand.vmem [shape: f32[2,4,256], index: 0, kind: input, shape index: {}]
  %s1 = inlined_call_operand.vmem [shape: f32[8,4], index: 1, kind: input, shape index: {}]
  %s2 = inlined_call_operand.vmem [shape: f32[8,1], index: 2, kind: input, shape index: {}]
  %s3 = inlined_call_operand.hbm [shape: f32[2,8,256], index: 3, kind: output, shape index: {}]
  %s4 = sld [smem:[#allocation0]]
  $region45: #{tpu_custom_call.1} parent=0
    _
  %s6 = ssub.s32 1, %s4
  %s7 = scalar_select 0, %s6, %s4
  $region1: #{tpu_custom_call.1} parent=0
    #allocation2 [shape = 'u8[8192]{0}', space=vmem, size = 0x2000, scoped, tag = 'output window, operand 0']
    #allocation3 [shape = 's32[2]{0}', space=sflag, size = 0x8, scoped, tag = 'scoped memory for tpu_custom_call.1']
    %8 = vsyncpa [#allocation3], 0
    %s9 = scalar_lea.sflag [#allocation3], 1
    %10 = vsyncpa %s9, 0
    loop: start=0, step=1, limit=6
    $region2: #{tpu_custom_call.1} parent=1 // loop_pre_header
      _
    $region3: #{tpu_custom_call.1} parent=1 // loop_header
      %s12 = sphi 0, %s16
      %p13 = scmp.ge.s32.totalorder %s12, 6
      %s19 = sphi 0, %s31
      %s20 = sphi 0, %s27
      %s21 = sphi 0, %s19
      %s22 = sphi 0, %s20
      %s23 = sphi 0, %s21
      %s24 = sphi 0, %s22
      %s36 = sphi 0, %s38
      %s39 = sphi 0, %s36
      %s40 = sphi 0, %s39
      %s56 = sphi 0, %s40
      %s60 = sphi 0, %s60
      %s62 = sphi 0, %s60
      %s63 = sphi 0, %s62
      %s77 = sphi 0, %s63
      %s81 = sphi 0, %s81
      %s83 = sphi 0, %s81
      %s84 = sphi 0, %s83
      %s98 = sphi 0, %s84
      %s106 = sphi 0, %s108
      %s109 = sphi 0, %s106
      %s110 = sphi 0, %s109
      %s126 = sphi 0, %s110
    $region4: #{tpu_custom_call.1} parent=1 // loop_header_branch
      %15 = sbr.rel (%p13) target = $region8
    $region5: #{tpu_custom_call.1} parent=1 // loop_body
      %s17 = ssub.s32 %s12, 1
      %s18 = ssub.s32 %s12, 2
      %s25 = sadd.s32 1, %s20
      %p26 = scmp.ge.s32.totalorder %s25, 2
      %s27 = scalar_select %p26, 0, %s25
      %s28 = sadd.s32 1, %s19
      %s29 = scalar_select %p26, %s28, %s19
      %p30 = scmp.ge.s32.totalorder %s29, 2
      %s31 = scalar_select %p30, 0, %s29
      %s32 = ssub.s32 %s19, %s31
      %s33 = ssub.s32 %s20, %s27
      %s34 = sor.u32 %s32, %s33
      %p35 = scmp.eq.s32.totalorder %s34, 0
      %s37 = sadd.s32 %s36, 1
      %s38 = scalar_select %p35, %s36, %s37
      %p41 = pneg %p35
      %p42 = scmp.eq.s32.totalorder %s12, 3
      %p43 = por %p41, %p42
      %p44 = scmp.ne.s32.totalorder %s36, %s39
      %p45 = scmp.eq.s32.totalorder %s12, 0
      %p46 = por %p44, %p45
      %p47 = scmp.ne.s32.totalorder %s36, %s39
      %p48 = scmp.eq.s32.totalorder %s17, 3
      %p49 = por %p47, %p48
      %p50 = scmp.ne.s32.totalorder %s39, %s40
      %p51 = scmp.eq.s32.totalorder %s17, 0
      %p52 = por %p50, %p51
      %p53 = scmp.ne.s32.totalorder %s39, %s40
      %p54 = scmp.eq.s32.totalorder %s18, 3
      %p55 = por %p53, %p54
      %p57 = scmp.ne.s32.totalorder %s40, %s56
      %p58 = scmp.eq.s32.totalorder %s18, 0
      %p59 = por %p57, %p58
      %s61 = sadd.s32 %s60, 1
      %p64 = scmp.eq.s32.totalorder %s12, 3
      %p65 = scmp.ne.s32.totalorder %s60, %s62
      %p66 = scmp.eq.s32.totalorder %s12, 0
      %p67 = por %p65, %p66
      %p68 = scmp.ne.s32.totalorder %s60, %s62
      %p69 = scmp.eq.s32.totalorder %s17, 3
      %p70 = por %p68, %p69
      %p71 = scmp.ne.s32.totalorder %s62, %s63
      %p72 = scmp.eq.s32.totalorder %s17, 0
      %p73 = por %p71, %p72
      %p74 = scmp.ne.s32.totalorder %s62, %s63
      %p75 = scmp.eq.s32.totalorder %s18, 3
      %p76 = por %p74, %p75
      %p78 = scmp.ne.s32.totalorder %s63, %s77
      %p79 = scmp.eq.s32.totalorder %s18, 0
      %p80 = por %p78, %p79
      %s82 = sadd.s32 %s81, 1
      %p85 = scmp.eq.s32.totalorder %s12, 3
      %p86 = scmp.ne.s32.totalorder %s81, %s83
      %p87 = scmp.eq.s32.totalorder %s12, 0
      %p88 = por %p86, %p87
      %p89 = scmp.ne.s32.totalorder %s81, %s83
      %p90 = scmp.eq.s32.totalorder %s17, 3
      %p91 = por %p89, %p90
      %p92 = scmp.ne.s32.totalorder %s83, %s84
      %p93 = scmp.eq.s32.totalorder %s17, 0
      %p94 = por %p92, %p93
      %p95 = scmp.ne.s32.totalorder %s83, %s84
      %p96 = scmp.eq.s32.totalorder %s18, 3
      %p97 = por %p95, %p96
      %p99 = scmp.ne.s32.totalorder %s84, %s98
      %p100 = scmp.eq.s32.totalorder %s18, 0
      %p101 = por %p99, %p100
      %s102 = ssub.s32 %s19, %s31
      %s103 = ssub.s32 %s20, %s27
      %s104 = sor.u32 %s102, %s103
      %p105 = scmp.eq.s32.totalorder %s104, 0
      %s107 = sadd.s32 %s106, 1
      %s108 = scalar_select %p105, %s106, %s107
      %p111 = pneg %p105
      %p112 = scmp.eq.s32.totalorder %s12, 3
      %p113 = por %p111, %p112
      %p114 = scmp.ne.s32.totalorder %s106, %s109
      %p115 = scmp.eq.s32.totalorder %s12, 0
      %p116 = por %p114, %p115
      %p117 = scmp.ne.s32.totalorder %s106, %s109
      %p118 = scmp.eq.s32.totalorder %s17, 3
      %p119 = por %p117, %p118
      %p120 = scmp.ne.s32.totalorder %s109, %s110
      %p121 = scmp.eq.s32.totalorder %s17, 0
      %p122 = por %p120, %p121
      %p123 = scmp.ne.s32.totalorder %s109, %s110
      %p124 = scmp.eq.s32.totalorder %s18, 3
      %p125 = por %p123, %p124
      %p127 = scmp.ne.s32.totalorder %s110, %s126
      %p128 = scmp.eq.s32.totalorder %s18, 0
      %p129 = por %p127, %p128
      %p130 = scmp.le.s32.totalorder 1, %s12
      %p131 = scmp.lt.s32.totalorder %s12, 5
      %p132 = pnand %p130, %p131
      %p133 = pneg %p132
      // Predicated region
      $region9: #{tpu_custom_call.1} parent=5 // pred_check
        _
      $region10: #{tpu_custom_call.1} parent=5 // pred_check_branch
        %135 = sbr.rel (%p132) target = $region12
      $region11: #{tpu_custom_call.1} parent=5 // pred_region
        %s136 = ssub.s32 %s12, 1
        // Predicated region
        $region13: #{tpu_custom_call.1} parent=11 // pred_check
          %p137 = pneg %p73
        $region14: #{tpu_custom_call.1} parent=11 // pred_check_branch
          %139 = sbr.rel (%p137) target = $region16
        $region15: #{tpu_custom_call.1} parent=11 // pred_region
          _
        $region16: #{tpu_custom_call.1} parent=11 // pred_fallthru
          _
        // Predicated region
        $region17: #{tpu_custom_call.1} parent=11 // pred_check
          %p140 = pneg %p94
        $region18: #{tpu_custom_call.1} parent=11 // pred_check_branch
          %142 = sbr.rel (%p140) target = $region20
        $region19: #{tpu_custom_call.1} parent=11 // pred_region
          _
        $region20: #{tpu_custom_call.1} parent=11 // pred_fallthru
          _
      $region12: #{tpu_custom_call.1} parent=5 // pred_fallthru
        _
      %p143 = scmp.lt.s32.totalorder %s12, 4
      // Predicated region
      $region21: #{tpu_custom_call.1} parent=5 // pred_check
        %p144 = pneg %p143
      $region22: #{tpu_custom_call.1} parent=5 // pred_check_branch
        %146 = sbr.rel (%p144) target = $region24
      $region23: #{tpu_custom_call.1} parent=5 // pred_region
        // Predicated region
        $region25: #{tpu_custom_call.1} parent=23 // pred_check
          %p147 = pneg %p46
        $region26: #{tpu_custom_call.1} parent=23 // pred_check_branch
          %149 = sbr.rel (%p147) target = $region28
        $region27: #{tpu_custom_call.1} parent=23 // pred_region
          %p150 = scmp.lt.s32.totalorder %s19, 1
          %s151 = scalar_select %p150, %s19, 1
          %p152 = scmp.lt.s32.totalorder %s20, 1
          %s153 = scalar_select %p152, %s20, 1
          %s154 = smul.addr %s151, 2
          %s155 = sadd.s32 %s153, %s154
          %s156 = smul.addr %s155, 4
          %s157 = scalar_lea.vmem %s0, %s156
        $region28: #{tpu_custom_call.1} parent=23 // pred_fallthru
          _
      $region24: #{tpu_custom_call.1} parent=5 // pred_fallthru
        _
      %p158 = scmp.le.s32.totalorder 1, %s12
      %p159 = scmp.lt.s32.totalorder %s12, 5
      %p160 = pnand %p158, %p159
      %p161 = pneg %p160
      // Predicated region
      $region29: #{tpu_custom_call.1} parent=5 // pred_check
        _
      $region30: #{tpu_custom_call.1} parent=5 // pred_check_branch
        %163 = sbr.rel (%p160) target = $region32
      $region31: #{tpu_custom_call.1} parent=5 // pred_region
        %s164 = ssub.s32 %s12, 1
        %p165 = scmp.lt.s32.totalorder %s21, 1
        %s166 = scalar_select %p165, %s21, 1
        %p167 = scmp.lt.s32.totalorder %s22, 1
        %s168 = scalar_select %p167, %s22, 1
        %s169 = smul.addr %s166, 2
        %s170 = sadd.s32 %s168, %s169
        %s171 = smul.addr %s170, 4
        %s172 = scalar_lea.vmem %s0, %s171
        %p173 = pneg %p52
        %p174 = pneg %p49
        %p175 = pneg %p73
        %p176 = pneg %p70
        %p177 = pneg %p94
        %p178 = pneg %p91
        %p179 = pneg %p122
        %p180 = pneg %p119
        %s181 = sand.u32 %s109, 1
        %s182 = scalar_lea.sflag [#allocation3], %s181
        %s183 = sand.u32 %s109, 1
        %s184 = smul.addr %s183, 8
        %s185 = scalar_lea.vmem [#allocation2], %s184
        %p186 = scmp.lt.s32.totalorder %s21, 1
        %s187 = scalar_select %p186, %s21, 1
        %p188 = scmp.lt.s32.totalorder %s22, 1
        %s189 = scalar_select %p188, %s22, 1
        %s190 = smul.addr %s187, 2
        %s191 = sadd.s32 %s189, %s190
        %s192 = smul.addr %s191, 4
        %s193 = scalar_lea.vmem %s0, %s192
        %v194 = vld [vmem:[%s1] sm:$0xff]
        %v195 = vld [vmem:[%s193] sm:$0xf]
        %v196 = vld [vmem:[%s2] sm:$0xff]
        %198 = vset.pattern.permute.xlu0 0
        %199 = vperm.xlu0 %198, %v196
        %v200 = vpop.permute.xlu0 %199
        %vm202 = vcmask 31744
        %v204 = vsel %vm202, %v194, 0
        %vm206 = vcmask 1043456
        %v208 = vsel %vm206, %v195, 0
        %210 = vmatpush.msra.mxu0 0.0
        %211 = vmatpush.msra.mxu0 0.0
        %212 = vmatpush.msra.mxu0 0.0
        %213 = vmatpush.msra.mxu0 0.0
        %214 = vmatpush.msra.mxu0 0.0
        %215 = vmatpush.msra.mxu0 0.0
        %216 = vmatpush.msra.mxu0 0.0
        %217 = vmatpush.msra.mxu0 0.0
        %218 = vmatpush.msra.mxu0 0.0
        %219 = vmatpush.msra.mxu0 0.0
        %220 = vmatpush.msra.mxu0 0.0
        %221 = vmatpush.msra.mxu0 0.0
        %222 = vmatpush.msra.mxu0 0.0
        %223 = vmatpush.msra.mxu0 0.0
        %224 = vmatpush.msra.mxu0 0.0
        %225 = vmatpush.msra.mxu0 %v208
        %226 = vmatmul.f32.gmra.mxu0 %v204
        %v227 = vpop.f32.mrf.mxu0
        %v228 = vadd.f32 %v200, %v227
        %229 = vdwg.mxu0
        %v230 = vmax.f32 %v228, 0.0
        %231 = vst [vmem:[%s185] sm:$0xff] %v230
        %s232 = sand.u32 %s109, 1
        %s233 = scalar_lea.sflag [#allocation3], %s232
        %s234 = sand.u32 %s109, 1
        %s235 = smul.addr %s234, 8
        %s236 = scalar_lea.vmem [#allocation2], %s235
        // Predicated region
        $region33: #{tpu_custom_call.1} parent=31 // pred_check
          %p237 = pneg %p119
        $region34: #{tpu_custom_call.1} parent=31 // pred_check_branch
          %239 = sbr.rel (%p237) target = $region36
        $region35: #{tpu_custom_call.1} parent=31 // pred_region
          %241 = vsyncadd %s233, 0
          %s242 = smul.addr %s21, 2
          %s243 = sadd.s32 %s22, %s242
          %s244 = smul.addr %s243, 8
          %s245 = scalar_lea.hbm %s3, %s244
          %s247 = sshll.u32 %s236, 4
          %s248 = int_to_ptr.vmem [resolvable:$true] %s247
          %s249 = sshll.u32 %s245, 4
          %s250 = int_to_ptr.hbm [resolvable:$true] %s249
          %252 = dma.vmem_to_hbm [thread:$0]  %s248, 128, %s250, %s233
        $region36: #{tpu_custom_call.1} parent=31 // pred_fallthru
          _
      $region32: #{tpu_custom_call.1} parent=5 // pred_fallthru
        _
      %p253 = scmp.le.s32.totalorder 2, %s12
      // Predicated region
      $region37: #{tpu_custom_call.1} parent=5 // pred_check
        %p254 = pneg %p253
      $region38: #{tpu_custom_call.1} parent=5 // pred_check_branch
        %256 = sbr.rel (%p254) target = $region40
      $region39: #{tpu_custom_call.1} parent=5 // pred_region
        %s257 = ssub.s32 %s12, 2
        // Predicated region
        $region41: #{tpu_custom_call.1} parent=39 // pred_check
          %p258 = pneg %p125
        $region42: #{tpu_custom_call.1} parent=39 // pred_check_branch
          %260 = sbr.rel (%p258) target = $region44
        $region43: #{tpu_custom_call.1} parent=39 // pred_region
          %s261 = sand.u32 %s110, 1
          %s262 = scalar_lea.sflag [#allocation3], %s261
          %s263 = sand.u32 %s110, 1
          %s264 = smul.addr %s263, 8
          %s265 = scalar_lea.vmem [#allocation2], %s264
          %267 = dma.done %s262, 128
        $region44: #{tpu_custom_call.1} parent=39 // pred_fallthru
          _
      $region40: #{tpu_custom_call.1} parent=5 // pred_fallthru
        _
    $region6: #{tpu_custom_call.1} parent=1 // loop_footer
      %s16 = sadd.s32 1, %s12
    $region7: #{tpu_custom_call.1} parent=1 // loop_footer_branch
      %11 = sbr.rel target = $region3
    $region8: #{tpu_custom_call.1} parent=1 // loop_exit
      _
    %268 = vsyncpa [#allocation3], 1
    %s269 = scalar_lea.sflag [#allocation3], 1
    %270 = vsyncpa %s269, 1

</llo_original>
